<compile_context>
chip_gen: v7x
topology: tpu7x:2x2x1
jax: 0.10.0
libtpu: 0.0.40
codegen_flags: <defaults>
</compile_context>

<pallas_src>
import functools

import jax
import jax.numpy as jnp
from jax.experimental import pallas as pl
from jax.experimental.pallas import tpu as pltpu


def _vq_embed_kernel(z_ref, wt_ref, o_ref, *, assume_one_hot):
    # z_ref : (1, K, TM) f32    wt_ref : (D, K) f32    o_ref : (1, D, TM)
    z = z_ref[0]                                        # (K, TM)
    wt = wt_ref[...]                                    # (D, K)

    if assume_one_hot:
        sel = z.astype(jnp.float32)                     # input already one-hot
    else:
        # torch.argmax over K with first-max-wins tie-breaking, all-2D ops
        # (no 1-D intermediates -> no layout shuffles).
        k = z.shape[0]
        m = jnp.max(z, axis=0, keepdims=True)                         # (1, TM)
        iota = jax.lax.broadcasted_iota(jnp.int32, z.shape, 0)        # (K, TM)
        idx = jnp.min(jnp.where(z == m, iota, k), axis=0, keepdims=True)
        sel = (iota == idx).astype(jnp.float32)                       # (K, TM)

    # (D, K) @ (K, TM) -> (D, TM). HIGHEST precision keeps gathered rows
    # bit-exact copies of the f32 table (torch index_select is exact).
    out = jnp.dot(
        wt, sel,
        preferred_element_type=jnp.float32,
        precision=jax.lax.Precision.HIGHEST,
    )
    o_ref[0] = out.astype(o_ref.dtype)


def _pick_tm(hw, cap=2048):
    """Largest multiple of 128 dividing hw and <= cap; else the full extent."""
    best = None
    t = 128
    while t <= min(cap, hw):
        if hw % t == 0:
            best = t
        t += 128
    return best if best is not None else hw


def vq_embedding_cat_forward(z_e_x, weight, *, tm=None, assume_one_hot=False):
    """z_e_x: (B, K, H, W) float32, weight: (K, D).  Returns (B, D, H, W)."""
    B, K, H, W = z_e_x.shape
    D = weight.shape[1]
    HW = H * W
    if tm is None:
        tm = _pick_tm(HW)
    assert HW % tm == 0, "spatial tile must divide H*W"

    z3 = z_e_x.reshape(B, K, HW)        # free row-major reshape, stays NCHW
    wt = jnp.transpose(weight)          # (D, K) -- tiny one-time transpose

    # VMEM budget: double-buffered input + output blocks, weight x2, headroom.
    block_bytes = 4 * tm * (K + D)
    vmem_need = 2 * block_bytes + 2 * 4 * K * D
    vmem_limit = int(min(max(2 * vmem_need + (4 << 20), 16 << 20), 32 << 20))

    cost = pl.CostEstimate(
        flops=2 * B * HW * K * D,
        transcendentals=0,
        bytes_accessed=4 * (B * HW * K + B * HW * D + K * D),
    )

    out3 = pl.pallas_call(
        functools.partial(_vq_embed_kernel, assume_one_hot=assume_one_hot),
        out_shape=jax.ShapeDtypeStruct((B, D, HW), weight.dtype),
        grid_spec=pltpu.PrefetchScalarGridSpec(
            num_scalar_prefetch=0,
            grid=(B, HW // tm),
            in_specs=[
                pl.BlockSpec((1, K, tm), lambda b, i: (b, 0, i)),
                # Grid-invariant index_map -> DMA'd once; residual cost is only
                # the 2*K*D*4 B double-buffer footprint (tiny here).
                pl.BlockSpec((D, K), lambda b, i: (0, 0)),
            ],
            out_specs=pl.BlockSpec((1, D, tm), lambda b, i: (b, 0, i)),
        ),
        compiler_params=pltpu.CompilerParams(
            dimension_semantics=("parallel", "parallel"),
            vmem_limit_bytes=vmem_limit,
        ),
        cost_estimate=cost,
    )(z3, wt)

    return out3.reshape(B, D, H, W)     # free reshape -> (B, D, H, W)


if __name__ == "__main__":
    # Small shapes consistent with the module: K codebook entries, D embed dim.
    B, K, H, W, D = 2, 8, 16, 16, 32

    key = jax.random.PRNGKey(0)
    k_w, k_idx = jax.random.split(key)

    # Deterministic embedding init: uniform(-1/K, 1/K), shape (K, D)
    weight = jax.random.uniform(
        k_w, (K, D), dtype=jnp.float32, minval=-1.0 / K, maxval=1.0 / K
    )

    # Deterministic one-hot input of shape (B, K, H, W)
    idx = jax.random.randint(k_idx, (B, H, W), 0, K)
    z_e_x = jnp.transpose(jax.nn.one_hot(idx, K, dtype=jnp.float32), (0, 3, 1, 2))

    # Default path: full torch-equivalent argmax (first-max tie-breaking).
    z_q = jax.block_until_ready(vq_embedding_cat_forward(z_e_x, weight))

    # Pure-JAX reference (argmax + gather), same semantics as torch.
    ref_idx = jnp.argmax(z_e_x, axis=1)                 # (B, H, W)
    ref = jnp.transpose(weight[ref_idx], (0, 3, 1, 2))  # (B, D, H, W)
    assert z_q.shape == (B, D, H, W)
    assert jnp.allclose(z_q, ref, atol=1e-6)

    # Fast path when the input is guaranteed one-hot (the module's contract).
    z_q_fast = jax.block_until_ready(
        vq_embedding_cat_forward(z_e_x, weight, assume_one_hot=True)
    )
    assert jnp.allclose(z_q_fast, ref, atol=1e-6)

    # TODO(synk): straight_through()'s autograd STE backward is out of scope
    # for this forward kernel; its forward output equals z_q (returned twice).
    print("KERNEL_OK")
</pallas_src>

<mosaic_0001>
module attributes {stable_mosaic.version = 11 : i64} {
  func.func @_vq_embed_kernel(%arg0: i32, %arg1: i32, %arg2: memref<1x8x256xf32, #tpu.memory_space<vmem>>, %arg3: memref<32x8xf32, #tpu.memory_space<vmem>>, %arg4: memref<1x32x256xf32, #tpu.memory_space<vmem>>) attributes {dimension_semantics = [#tpu.dimension_semantics<parallel>, #tpu.dimension_semantics<parallel>], iteration_bounds = array<i64: 2, 1>, scalar_prefetch = 0 : i64, scratch_operands = 0 : i64, tpu.core_type = #tpu.core_type<tc>, window_params = [{transform_indices = @transform_0, window_bounds = array<i64: 1, 8, 256>}, {pipeline_mode = #tpu.pipeline_mode<synchronous>, transform_indices = @transform_1, window_bounds = array<i64: 32, 8>}, {transform_indices = @transform_2, window_bounds = array<i64: 1, 32, 256>}]} {
    %c0 = arith.constant 0 : index
    %c0_0 = arith.constant 0 : index
    %c0_1 = arith.constant 0 : index
    %0 = vector.load %arg2[%c0, %c0_0, %c0_1] : memref<1x8x256xf32, #tpu.memory_space<vmem>>, vector<1x8x256xf32>
    %1 = vector.shape_cast %0 : vector<1x8x256xf32> to vector<8x256xf32>
    %c0_2 = arith.constant 0 : index
    %c0_3 = arith.constant 0 : index
    %2 = vector.load %arg3[%c0_2, %c0_3] : memref<32x8xf32, #tpu.memory_space<vmem>>, vector<32x8xf32>
    %cst = arith.constant dense<0xFF800000> : vector<256xf32>
    %3 = vector.multi_reduction <maximumf>, %1, %cst [0] : vector<8x256xf32> to vector<256xf32>
    %4 = vector.shape_cast %3 : vector<256xf32> to vector<1x256xf32>
    %5 = tpu.iota {dimensions = array<i32: 0>} : vector<8x256xi32>
    %6 = vector.broadcast %4 : vector<1x256xf32> to vector<8x256xf32>
    %7 = arith.cmpf oeq, %1, %6 : vector<8x256xf32>
    %c8_i32 = arith.constant 8 : i32
    %8 = vector.broadcast %c8_i32 : i32 to vector<8x256xi32>
    %9 = arith.select %7, %5, %8 : vector<8x256xi1>, vector<8x256xi32>
    %cst_4 = arith.constant dense<2147483647> : vector<256xi32>
    %10 = vector.multi_reduction <minsi>, %9, %cst_4 [0] : vector<8x256xi32> to vector<256xi32>
    %11 = vector.shape_cast %10 : vector<256xi32> to vector<1x256xi32>
    %12 = vector.broadcast %11 : vector<1x256xi32> to vector<8x256xi32>
    %13 = arith.cmpi eq, %5, %12 : vector<8x256xi32>
    %14 = arith.extui %13 : vector<8x256xi1> to vector<8x256xi32>
    %15 = arith.sitofp %14 : vector<8x256xi32> to vector<8x256xf32>
    %cst_5 = arith.constant dense<0.000000e+00> : vector<32x256xf32>
    %16 = tpu.matmul %2, %15, %cst_5 {dimension_numbers = #tpu.dot_dimension_numbers<[1], [0], [0], [1], [0, 0, 1, 1], [], []>, precision = #tpu.contract_precision<fp32>} : vector<32x8xf32>, vector<8x256xf32>, vector<32x256xf32> -> vector<32x256xf32>
    %c0_6 = arith.constant 0 : index
    %c0_7 = arith.constant 0 : index
    %c0_8 = arith.constant 0 : index
    %17 = vector.load %arg4[%c0_6, %c0_7, %c0_8] : memref<1x32x256xf32, #tpu.memory_space<vmem>>, vector<1x32x256xf32>
    %18 = vector.shape_cast %17 : vector<1x32x256xf32> to vector<32x256xf32>
    %19 = vector.shape_cast %16 : vector<32x256xf32> to vector<1x32x256xf32>
    tpu.vector_store %arg4[%c0_6, %c0_7, %c0_8], %19 {strides = array<i32>} : memref<1x32x256xf32, #tpu.memory_space<vmem>>, vector<1x32x256xf32>,
    return
  }
  func.func @transform_0(%arg0: i32, %arg1: i32) -> (i32, i32, i32) {
    %c0_i32 = arith.constant 0 : i32
    %c0_i32_0 = arith.constant 0 : i32
    return %arg0, %c0_i32, %arg1 : i32, i32, i32
  }
  func.func @transform_1(%arg0: i32, %arg1: i32) -> (i32, i32) {
    %c0_i32 = arith.constant 0 : i32
    %c0_i32_0 = arith.constant 0 : i32
    %c0_i32_1 = arith.constant 0 : i32
    return %c0_i32, %c0_i32_0 : i32, i32
  }
  func.func @transform_2(%arg0: i32, %arg1: i32) -> (i32, i32, i32) {
    %c0_i32 = arith.constant 0 : i32
    %c0_i32_0 = arith.constant 0 : i32
    return %arg0, %c0_i32, %arg1 : i32, i32, i32
  }
}

</mosaic_0001>

<llo_original>
// kernel: tpu_custom_call.1
$region0: #{tpu_custom_call.1}
  #allocation0 [shape = 'u32[]', space=smem, size = 0x4, offset = 0x4, fixed_abs, tag = 'smem constant byte address 0x4 - core index']
  #allocation1 [shape = 'u32[144,128]{1,0:T(1,128)}', space=vmem, size = 0x12000, scoped, tag = 'internal scratch']
  %s0 = inlined_call_operand.vmem [shape: f32[2,8,256], index: 0, kind: input, shape index: {}]
  %s1 = inlined_call_operand.vmem [shape: f32[32,8], index: 1, kind: input, shape index: {}]
  %s2 = inlined_call_operand.hbm [shape: f32[2,32,256], index: 2, kind: output, shape index: {}]
  %s3 = sld [smem:[#allocation0]]
  $region41: #{tpu_custom_call.1} parent=0
    _
  %s5 = ssub.s32 1, %s3
  %s6 = scalar_select 0, %s5, %s3
  $region1: #{tpu_custom_call.1} parent=0
    #allocation2 [shape = 'u8[65536]{0}', space=vmem, size = 0x10000, scoped, tag = 'output window, operand 0']
    #allocation3 [shape = 's32[2]{0}', space=sflag, size = 0x8, scoped, tag = 'scoped memory for tpu_custom_call.1']
    %7 = vsyncpa [#allocation3], 0
    %s8 = scalar_lea.sflag [#allocation3], 1
    %9 = vsyncpa %s8, 0
    loop: start=0, step=1, limit=4
    $region2: #{tpu_custom_call.1} parent=1 // loop_pre_header
      _
    $region3: #{tpu_custom_call.1} parent=1 // loop_header
      %s11 = sphi 0, %s15
      %p12 = scmp.ge.s32.totalorder %s11, 4
      %s18 = sphi 0, %s30
      %s19 = sphi 0, %s26
      %s20 = sphi 0, %s18
      %s21 = sphi 0, %s19
      %s22 = sphi 0, %s20
      %s23 = sphi 0, %s21
      %s35 = sphi 0, %s37
      %s38 = sphi 0, %s35
      %s39 = sphi 0, %s38
      %s55 = sphi 0, %s39
      %s59 = sphi 0, %s59
      %s61 = sphi 0, %s59
      %s62 = sphi 0, %s61
      %s76 = sphi 0, %s62
      %s84 = sphi 0, %s86
      %s87 = sphi 0, %s84
      %s88 = sphi 0, %s87
      %s104 = sphi 0, %s88
    $region4: #{tpu_custom_call.1} parent=1 // loop_header_branch
      %14 = sbr.rel (%p12) target = $region8
    $region5: #{tpu_custom_call.1} parent=1 // loop_body
      %s16 = ssub.s32 %s11, 1
      %s17 = ssub.s32 %s11, 2
      %s24 = sadd.s32 1, %s19
      %p25 = scmp.ge.s32.totalorder %s24, 1
      %s26 = scalar_select %p25, 0, %s24
      %s27 = sadd.s32 1, %s18
      %s28 = scalar_select %p25, %s27, %s18
      %p29 = scmp.ge.s32.totalorder %s28, 2
      %s30 = scalar_select %p29, 0, %s28
      %s31 = ssub.s32 %s18, %s30
      %s32 = ssub.s32 %s19, %s26
      %s33 = sor.u32 %s31, %s32
      %p34 = scmp.eq.s32.totalorder %s33, 0
      %s36 = sadd.s32 %s35, 1
      %s37 = scalar_select %p34, %s35, %s36
      %p40 = pneg %p34
      %p41 = scmp.eq.s32.totalorder %s11, 1
      %p42 = por %p40, %p41
      %p43 = scmp.ne.s32.totalorder %s35, %s38
      %p44 = scmp.eq.s32.totalorder %s11, 0
      %p45 = por %p43, %p44
      %p46 = scmp.ne.s32.totalorder %s35, %s38
      %p47 = scmp.eq.s32.totalorder %s16, 1
      %p48 = por %p46, %p47
      %p49 = scmp.ne.s32.totalorder %s38, %s39
      %p50 = scmp.eq.s32.totalorder %s16, 0
      %p51 = por %p49, %p50
      %p52 = scmp.ne.s32.totalorder %s38, %s39
      %p53 = scmp.eq.s32.totalorder %s17, 1
      %p54 = por %p52, %p53
      %p56 = scmp.ne.s32.totalorder %s39, %s55
      %p57 = scmp.eq.s32.totalorder %s17, 0
      %p58 = por %p56, %p57
      %s60 = sadd.s32 %s59, 1
      %p63 = scmp.eq.s32.totalorder %s11, 1
      %p64 = scmp.ne.s32.totalorder %s59, %s61
      %p65 = scmp.eq.s32.totalorder %s11, 0
      %p66 = por %p64, %p65
      %p67 = scmp.ne.s32.totalorder %s59, %s61
      %p68 = scmp.eq.s32.totalorder %s16, 1
      %p69 = por %p67, %p68
      %p70 = scmp.ne.s32.totalorder %s61, %s62
      %p71 = scmp.eq.s32.totalorder %s16, 0
      %p72 = por %p70, %p71
      %p73 = scmp.ne.s32.totalorder %s61, %s62
      %p74 = scmp.eq.s32.totalorder %s17, 1
      %p75 = por %p73, %p74
      %p77 = scmp.ne.s32.totalorder %s62, %s76
      %p78 = scmp.eq.s32.totalorder %s17, 0
      %p79 = por %p77, %p78
      %s80 = ssub.s32 %s18, %s30
      %s81 = ssub.s32 %s19, %s26
      %s82 = sor.u32 %s80, %s81
      %p83 = scmp.eq.s32.totalorder %s82, 0
      %s85 = sadd.s32 %s84, 1
      %s86 = scalar_select %p83, %s84, %s85
      %p89 = pneg %p83
      %p90 = scmp.eq.s32.totalorder %s11, 1
      %p91 = por %p89, %p90
      %p92 = scmp.ne.s32.totalorder %s84, %s87
      %p93 = scmp.eq.s32.totalorder %s11, 0
      %p94 = por %p92, %p93
      %p95 = scmp.ne.s32.totalorder %s84, %s87
      %p96 = scmp.eq.s32.totalorder %s16, 1
      %p97 = por %p95, %p96
      %p98 = scmp.ne.s32.totalorder %s87, %s88
      %p99 = scmp.eq.s32.totalorder %s16, 0
      %p100 = por %p98, %p99
      %p101 = scmp.ne.s32.totalorder %s87, %s88
      %p102 = scmp.eq.s32.totalorder %s17, 1
      %p103 = por %p101, %p102
      %p105 = scmp.ne.s32.totalorder %s88, %s104
      %p106 = scmp.eq.s32.totalorder %s17, 0
      %p107 = por %p105, %p106
      %p108 = scmp.le.s32.totalorder 1, %s11
      %p109 = scmp.lt.s32.totalorder %s11, 3
      %p110 = pnand %p108, %p109
      %p111 = pneg %p110
      // Predicated region
      $region9: #{tpu_custom_call.1} parent=5 // pred_check
        _
      $region10: #{tpu_custom_call.1} parent=5 // pred_check_branch
        %113 = sbr.rel (%p110) target = $region12
      $region11: #{tpu_custom_call.1} parent=5 // pred_region
        %s114 = ssub.s32 %s11, 1
        // Predicated region
        $region13: #{tpu_custom_call.1} parent=11 // pred_check
          %p115 = pneg %p72
        $region14: #{tpu_custom_call.1} parent=11 // pred_check_branch
          %117 = sbr.rel (%p115) target = $region16
        $region15: #{tpu_custom_call.1} parent=11 // pred_region
          _
        $region16: #{tpu_custom_call.1} parent=11 // pred_fallthru
          _
      $region12: #{tpu_custom_call.1} parent=5 // pred_fallthru
        _
      %p118 = scmp.lt.s32.totalorder %s11, 2
      // Predicated region
      $region17: #{tpu_custom_call.1} parent=5 // pred_check
        %p119 = pneg %p118
      $region18: #{tpu_custom_call.1} parent=5 // pred_check_branch
        %121 = sbr.rel (%p119) target = $region20
      $region19: #{tpu_custom_call.1} parent=5 // pred_region
        // Predicated region
        $region21: #{tpu_custom_call.1} parent=19 // pred_check
          %p122 = pneg %p45
        $region22: #{tpu_custom_call.1} parent=19 // pred_check_branch
          %124 = sbr.rel (%p122) target = $region24
        $region23: #{tpu_custom_call.1} parent=19 // pred_region
          %s125 = smul.u32 2, %s19
          %p126 = scmp.lt.s32.totalorder %s18, 1
          %s127 = scalar_select %p126, %s18, 1
          %p128 = scmp.lt.s32.totalorder %s125, 1
          %s129 = scalar_select %p128, %s125, 1
          %s130 = smul.addr %s127, 2
          %s131 = sadd.s32 %s129, %s130
          %s132 = smul.addr %s131, 8
          %s133 = scalar_lea.vmem %s0, %s132
          %s134 = smul.u32 2, %s19
        $region24: #{tpu_custom_call.1} parent=19 // pred_fallthru
          _
      $region20: #{tpu_custom_call.1} parent=5 // pred_fallthru
        _
      %p135 = scmp.le.s32.totalorder 1, %s11
      %p136 = scmp.lt.s32.totalorder %s11, 3
      %p137 = pnand %p135, %p136
      %p138 = pneg %p137
      // Predicated region
      $region25: #{tpu_custom_call.1} parent=5 // pred_check
        _
      $region26: #{tpu_custom_call.1} parent=5 // pred_check_branch
        %140 = sbr.rel (%p137) target = $region28
      $region27: #{tpu_custom_call.1} parent=5 // pred_region
        %s141 = ssub.s32 %s11, 1
        %s142 = smul.u32 2, %s21
        %p143 = scmp.lt.s32.totalorder %s20, 1
        %s144 = scalar_select %p143, %s20, 1
        %p145 = scmp.lt.s32.totalorder %s142, 1
        %s146 = scalar_select %p145, %s142, 1
        %s147 = smul.addr %s144, 2
        %s148 = sadd.s32 %s146, %s147
        %s149 = smul.addr %s148, 8
        %s150 = scalar_lea.vmem %s0, %s149
        %p151 = pneg %p51
        %p152 = pneg %p48
        %p153 = pneg %p72
        %p154 = pneg %p69
        %p155 = pneg %p100
        %p156 = pneg %p97
        %s157 = sand.u32 %s87, 1
        %s158 = scalar_lea.sflag [#allocation3], %s157
        %s159 = sand.u32 %s87, 1
        %s160 = smul.addr %s159, 64
        %s161 = scalar_lea.vmem [#allocation2], %s160
        %s162 = smul.u32 2, %s21
        %p163 = scmp.lt.s32.totalorder %s20, 1
        %s164 = scalar_select %p163, %s20, 1
        %p165 = scmp.lt.s32.totalorder %s162, 1
        %s166 = scalar_select %p165, %s162, 1
        %s167 = smul.addr %s164, 2
        %s168 = sadd.s32 %s166, %s167
        %s169 = smul.addr %s168, 8
        %s170 = scalar_lea.vmem %s0, %s169
        %s171 = smul.u32 2, %s21
        %s172 = smul.u32 2, %s21
        %v173 = vld [vmem:[%s170] sm:$0xff]
        %v174 = vld [vmem:[%s170 + $0x8] sm:$0xff]
        %v175 = vld [vmem:[%s1] sm:$0xff]
        %v176 = vld [vmem:[%s1 + $0x8] sm:$0xff]
        %v177 = vld [vmem:[%s1 + $0x10] sm:$0xff]
        %v178 = vld [vmem:[%s1 + $0x18] sm:$0xff]
        %v179 = vrot.slane %v173, 4
        %v180 = vmax.f32 %v173, %v179
        %v181 = vrot.slane %v180, 2
        %v182 = vmax.f32 %v180, %v181
        %v183 = vrot.slane %v182, 1
        %v184 = vmax.f32 %v182, %v183
        %v185 = vrot.slane %v174, 4
        %v186 = vmax.f32 %v174, %v185
        %v187 = vrot.slane %v186, 2
        %v188 = vmax.f32 %v186, %v187
        %v189 = vrot.slane %v188, 1
        %v190 = vmax.f32 %v188, %v189
        %v191 = vlaneseq
        %v192 = vshrl.u32 %v191, 7
        %vm193 = vcmp.eq.f32.partialorder %v173, %v184
        %vm194 = vcmp.eq.f32.partialorder %v174, %v190
        %v195 = vsel %vm193, %v192, 8
        %v196 = vsel %vm194, %v192, 8
        %v197 = vrot.slane %v195, 4
        %vm198 = vcmp.lt.s32.totalorder %v195, %v197
        %v199 = vsel %vm198, %v195, %v197
        %v200 = vrot.slane %v199, 2
        %vm201 = vcmp.lt.s32.totalorder %v199, %v200
        %v202 = vsel %vm201, %v199, %v200
        %v203 = vrot.slane %v202, 1
        %vm204 = vcmp.lt.s32.totalorder %v202, %v203
        %v205 = vsel %vm204, %v202, %v203
        %v206 = vrot.slane %v196, 4
        %vm207 = vcmp.lt.s32.totalorder %v196, %v206
        %v208 = vsel %vm207, %v196, %v206
        %v209 = vrot.slane %v208, 2
        %vm210 = vcmp.lt.s32.totalorder %v208, %v209
        %v211 = vsel %vm210, %v208, %v209
        %v212 = vrot.slane %v211, 1
        %vm213 = vcmp.lt.s32.totalorder %v211, %v212
        %v214 = vsel %vm213, %v211, %v212
        %vm215 = vcmp.eq.s32.totalorder %v192, %v205
        %vm216 = vcmp.eq.s32.totalorder %v192, %v214
        %v217 = vsel %vm215, 1, 0
        %v218 = vsel %vm216, 1, 0
        %v219 = vcvt.s32.f32 %v217
        %v220 = vcvt.s32.f32 %v218
        %vm221 = vcmask 64512
        %v223 = vsel %vm221, %v175, 0
        %v226 = vsel %vm221, %v176, 0
        %v229 = vsel %vm221, %v177, 0
        %v232 = vsel %vm221, %v178, 0
        %v234 = vand.u32 %v220, 4294901760
        %235 = vmatprep.subr.mxu0 %v234
        %v236 = vand.u32 %v219, 4294901760
        %237 = vmatpush1.msra.mxu0 %v236
        %238 = vmatprep.subr.mxu0 0.0
        %239 = vmatpush1.msra.mxu0 0.0
        %240 = vmatprep.subr.mxu0 0.0
        %241 = vmatpush1.msra.mxu0 0.0
        %242 = vmatprep.subr.mxu0 0.0
        %243 = vmatpush1.msra.mxu0 0.0
        %244 = vmatprep.subr.mxu0 0.0
        %245 = vmatpush1.msra.mxu0 0.0
        %246 = vmatprep.subr.mxu0 0.0
        %247 = vmatpush1.msra.mxu0 0.0
        %248 = vmatprep.subr.mxu0 0.0
        %249 = vmatpush1.msra.mxu0 0.0
        %250 = vmatprep.subr.mxu0 0.0
        %251 = vmatpush1.msra.mxu0 0.0
        %252 = vmatprep.subr.mxu0 0.0
        %253 = vmatpush1.msra.mxu0 0.0
        %254 = vmatprep.subr.mxu0 0.0
        %255 = vmatpush1.msra.mxu0 0.0
        %256 = vmatprep.subr.mxu0 0.0
        %257 = vmatpush1.msra.mxu0 0.0
        %258 = vmatprep.subr.mxu0 0.0
        %259 = vmatpush1.msra.mxu0 0.0
        %260 = vmatprep.subr.mxu0 0.0
        %261 = vmatpush1.msra.mxu0 0.0
        %262 = vmatprep.subr.mxu0 0.0
        %263 = vmatpush1.msra.mxu0 0.0
        %264 = vmatprep.subr.mxu0 0.0
        %265 = vmatpush1.msra.mxu0 0.0
        %266 = vmatprep.subr.mxu0 0.0
        %267 = vmatpush1.msra.mxu0 0.0
        %268 = vmatprep.subr.mxu0 0.0
        %269 = vmatpush1.msra.mxu0 0.0
        %270 = vmatprep.subr.mxu0 0.0
        %271 = vmatpush1.msra.mxu0 0.0
        %272 = vmatprep.subr.mxu0 0.0
        %273 = vmatpush1.msra.mxu0 0.0
        %274 = vmatprep.subr.mxu0 0.0
        %275 = vmatpush1.msra.mxu0 0.0
        %276 = vmatprep.subr.mxu0 0.0
        %277 = vmatpush1.msra.mxu0 0.0
        %278 = vmatprep.subr.mxu0 0.0
        %279 = vmatpush1.msra.mxu0 0.0
        %280 = vmatprep.subr.mxu0 0.0
        %281 = vmatpush1.msra.mxu0 0.0
        %282 = vmatprep.subr.mxu0 0.0
        %283 = vmatpush1.msra.mxu0 0.0
        %284 = vmatprep.subr.mxu0 0.0
        %285 = vmatpush1.msra.mxu0 0.0
        %286 = vmatprep.subr.mxu0 0.0
        %287 = vmatpush1.msra.mxu0 0.0
        %288 = vmatprep.subr.mxu0 0.0
        %289 = vmatpush1.msra.mxu0 0.0
        %290 = vmatprep.subr.mxu0 0.0
        %291 = vmatpush1.msra.mxu0 0.0
        %292 = vmatprep.subr.mxu0 0.0
        %293 = vmatpush1.msra.mxu0 0.0
        %294 = vmatprep.subr.mxu0 0.0
        %295 = vmatpush1.msra.mxu0 0.0
        %296 = vmatprep.subr.mxu0 0.0
        %297 = vmatpush1.msra.mxu0 0.0
        %298 = vmatprep.subr.mxu0 0.0
        %299 = vmatpush1.msra.mxu0 0.0
        %300 = vmatprep.mubr.f32.mxu0 0.0
        %v301 = vand.u32 %v223, 4294901760
        %v302 = vsub.f32 %v223, %v301
        %v303 = vand.u32 %v302, 4294901760
        %v304 = vsub.f32 %v302, %v303
        %v305 = vand.u32 %v304, 4294901760
        %306 = vmatmul.mubr.f32.gmra.mrb[0].mxu0 %v305
        %v307 = vpop.f32.mrb[0].mxu0
        %v308 = vadd.f32 0.0, %v307
        %v309 = vpop.f32.mrb[0].mxu0
        %v310 = vadd.f32 0.0, %v309
        %311 = vmatprep.mubr.f32.mxu0 0.0
        %v312 = vand.u32 %v226, 4294901760
        %v313 = vsub.f32 %v226, %v312
        %v314 = vand.u32 %v313, 4294901760
        %v315 = vsub.f32 %v313, %v314
        %v316 = vand.u32 %v315, 4294901760
        %317 = vmatmul.mubr.f32.gmra.mrb[0].mxu0 %v316
        %v318 = vpop.f32.mrb[0].mxu0
        %v319 = vadd.f32 0.0, %v318
        %v320 = vpop.f32.mrb[0].mxu0
        %v321 = vadd.f32 0.0, %v320
        %322 = vmatprep.mubr.f32.mxu0 0.0
        %v323 = vand.u32 %v229, 4294901760
        %v324 = vsub.f32 %v229, %v323
        %v325 = vand.u32 %v324, 4294901760
        %v326 = vsub.f32 %v324, %v325
        %v327 = vand.u32 %v326, 4294901760
        %328 = vmatmul.mubr.f32.gmra.mrb[0].mxu0 %v327
        %v329 = vpop.f32.mrb[0].mxu0
        %v330 = vadd.f32 0.0, %v329
        %v331 = vpop.f32.mrb[0].mxu0
        %v332 = vadd.f32 0.0, %v331
        %333 = vmatprep.mubr.f32.mxu0 0.0
        %v334 = vand.u32 %v232, 4294901760
        %v335 = vsub.f32 %v232, %v334
        %v336 = vand.u32 %v335, 4294901760
        %v337 = vsub.f32 %v335, %v336
        %v338 = vand.u32 %v337, 4294901760
        %339 = vmatmul.mubr.f32.gmra.mrb[0].mxu0 %v338
        %v340 = vpop.f32.mrb[0].mxu0
        %v341 = vadd.f32 0.0, %v340
        %v342 = vpop.f32.mrb[0].mxu0
        %v343 = vadd.f32 0.0, %v342
        %344 = vdwg.mxu0
        %v345 = vand.u32 %v220, 4294901760
        %v346 = vsub.f32 %v220, %v345
        %v347 = vand.u32 %v346, 4294901760
        %v348 = vsub.f32 %v346, %v347
        %v349 = vand.u32 %v348, 4294901760
        %350 = vmatprep.subr.mxu0 %v349
        %v351 = vand.u32 %v219, 4294901760
        %v352 = vsub.f32 %v219, %v351
        %v353 = vand.u32 %v352, 4294901760
        %v354 = vsub.f32 %v352, %v353
        %v355 = vand.u32 %v354, 4294901760
        %356 = vmatpush1.msra.mxu0 %v355
        %357 = vmatprep.subr.mxu0 0.0
        %358 = vmatpush1.msra.mxu0 0.0
        %359 = vmatprep.subr.mxu0 0.0
        %360 = vmatpush1.msra.mxu0 0.0
        %361 = vmatprep.subr.mxu0 0.0
        %362 = vmatpush1.msra.mxu0 0.0
        %363 = vmatprep.subr.mxu0 0.0
        %364 = vmatpush1.msra.mxu0 0.0
        %365 = vmatprep.subr.mxu0 0.0
        %366 = vmatpush1.msra.mxu0 0.0
        %367 = vmatprep.subr.mxu0 0.0
        %368 = vmatpush1.msra.mxu0 0.0
        %369 = vmatprep.subr.mxu0 0.0
        %370 = vmatpush1.msra.mxu0 0.0
        %371 = vmatprep.subr.mxu0 0.0
        %372 = vmatpush1.msra.mxu0 0.0
        %373 = vmatprep.subr.mxu0 0.0
        %374 = vmatpush1.msra.mxu0 0.0
        %375 = vmatprep.subr.mxu0 0.0
        %376 = vmatpush1.msra.mxu0 0.0
        %377 = vmatprep.subr.mxu0 0.0
        %378 = vmatpush1.msra.mxu0 0.0
        %379 = vmatprep.subr.mxu0 0.0
        %380 = vmatpush1.msra.mxu0 0.0
        %381 = vmatprep.subr.mxu0 0.0
        %382 = vmatpush1.msra.mxu0 0.0
        %383 = vmatprep.subr.mxu0 0.0
        %384 = vmatpush1.msra.mxu0 0.0
        %385 = vmatprep.subr.mxu0 0.0
        %386 = vmatpush1.msra.mxu0 0.0
        %387 = vmatprep.subr.mxu0 0.0
        %388 = vmatpush1.msra.mxu0 0.0
        %389 = vmatprep.subr.mxu0 0.0
        %390 = vmatpush1.msra.mxu0 0.0
        %391 = vmatprep.subr.mxu0 0.0
        %392 = vmatpush1.msra.mxu0 0.0
        %393 = vmatprep.subr.mxu0 0.0
        %394 = vmatpush1.msra.mxu0 0.0
        %395 = vmatprep.subr.mxu0 0.0
        %396 = vmatpush1.msra.mxu0 0.0
        %397 = vmatprep.subr.mxu0 0.0
        %398 = vmatpush1.msra.mxu0 0.0
        %399 = vmatprep.subr.mxu0 0.0
        %400 = vmatpush1.msra.mxu0 0.0
        %401 = vmatprep.subr.mxu0 0.0
        %402 = vmatpush1.msra.mxu0 0.0
        %403 = vmatprep.subr.mxu0 0.0
        %404 = vmatpush1.msra.mxu0 0.0
        %405 = vmatprep.subr.mxu0 0.0
        %406 = vmatpush1.msra.mxu0 0.0
        %407 = vmatprep.subr.mxu0 0.0
        %408 = vmatpush1.msra.mxu0 0.0
        %409 = vmatprep.subr.mxu0 0.0
        %410 = vmatpush1.msra.mxu0 0.0
        %411 = vmatprep.subr.mxu0 0.0
        %412 = vmatpush1.msra.mxu0 0.0
        %413 = vmatprep.subr.mxu0 0.0
        %414 = vmatpush1.msra.mxu0 0.0
        %415 = vmatprep.subr.mxu0 0.0
        %416 = vmatpush1.msra.mxu0 0.0
        %417 = vmatprep.subr.mxu0 0.0
        %418 = vmatpush1.msra.mxu0 0.0
        %419 = vmatprep.mubr.f32.mxu0 0.0
        %v420 = vand.u32 %v223, 4294901760
        %421 = vmatmul.mubr.f32.gmra.mrb[0].mxu0 %v420
        %v422 = vpop.f32.mrb[0].mxu0
        %v423 = vadd.f32 %v308, %v422
        %v424 = vpop.f32.mrb[0].mxu0
        %v425 = vadd.f32 %v310, %v424
        %426 = vmatprep.mubr.f32.mxu0 0.0
        %v427 = vand.u32 %v226, 4294901760
        %428 = vmatmul.mubr.f32.gmra.mrb[0].mxu0 %v427
        %v429 = vpop.f32.mrb[0].mxu0
        %v430 = vadd.f32 %v319, %v429
        %v431 = vpop.f32.mrb[0].mxu0
        %v432 = vadd.f32 %v321, %v431
        %433 = vmatprep.mubr.f32.mxu0 0.0
        %v434 = vand.u32 %v229, 4294901760
        %435 = vmatmul.mubr.f32.gmra.mrb[0].mxu0 %v434
        %v436 = vpop.f32.mrb[0].mxu0
        %v437 = vadd.f32 %v330, %v436
        %v438 = vpop.f32.mrb[0].mxu0
        %v439 = vadd.f32 %v332, %v438
        %440 = vmatprep.mubr.f32.mxu0 0.0
        %v441 = vand.u32 %v232, 4294901760
        %442 = vmatmul.mubr.f32.gmra.mrb[0].mxu0 %v441
        %v443 = vpop.f32.mrb[0].mxu0
        %v444 = vadd.f32 %v341, %v443
        %v445 = vpop.f32.mrb[0].mxu0
        %v446 = vadd.f32 %v343, %v445
        %447 = vdwg.mxu0
        %v448 = vand.u32 %v220, 4294901760
        %v449 = vsub.f32 %v220, %v448
        %450 = vmatprep.subr.mxu0 %v449
        %v451 = vand.u32 %v219, 4294901760
        %v452 = vsub.f32 %v219, %v451
        %453 = vmatpush1.msra.mxu0 %v452
        %454 = vmatprep.subr.mxu0 0.0
        %455 = vmatpush1.msra.mxu0 0.0
        %456 = vmatprep.subr.mxu0 0.0
        %457 = vmatpush1.msra.mxu0 0.0
        %458 = vmatprep.subr.mxu0 0.0
        %459 = vmatpush1.msra.mxu0 0.0
        %460 = vmatprep.subr.mxu0 0.0
        %461 = vmatpush1.msra.mxu0 0.0
        %462 = vmatprep.subr.mxu0 0.0
        %463 = vmatpush1.msra.mxu0 0.0
        %464 = vmatprep.subr.mxu0 0.0
        %465 = vmatpush1.msra.mxu0 0.0
        %466 = vmatprep.subr.mxu0 0.0
        %467 = vmatpush1.msra.mxu0 0.0
        %468 = vmatprep.subr.mxu0 0.0
        %469 = vmatpush1.msra.mxu0 0.0
        %470 = vmatprep.subr.mxu0 0.0
        %471 = vmatpush1.msra.mxu0 0.0
        %472 = vmatprep.subr.mxu0 0.0
        %473 = vmatpush1.msra.mxu0 0.0
        %474 = vmatprep.subr.mxu0 0.0
        %475 = vmatpush1.msra.mxu0 0.0
        %476 = vmatprep.subr.mxu0 0.0
        %477 = vmatpush1.msra.mxu0 0.0
        %478 = vmatprep.subr.mxu0 0.0
        %479 = vmatpush1.msra.mxu0 0.0
        %480 = vmatprep.subr.mxu0 0.0
        %481 = vmatpush1.msra.mxu0 0.0
        %482 = vmatprep.subr.mxu0 0.0
        %483 = vmatpush1.msra.mxu0 0.0
        %484 = vmatprep.subr.mxu0 0.0
        %485 = vmatpush1.msra.mxu0 0.0
        %486 = vmatprep.subr.mxu0 0.0
        %487 = vmatpush1.msra.mxu0 0.0
        %488 = vmatprep.subr.mxu0 0.0
        %489 = vmatpush1.msra.mxu0 0.0
        %490 = vmatprep.subr.mxu0 0.0
        %491 = vmatpush1.msra.mxu0 0.0
        %492 = vmatprep.subr.mxu0 0.0
        %493 = vmatpush1.msra.mxu0 0.0
        %494 = vmatprep.subr.mxu0 0.0
        %495 = vmatpush1.msra.mxu0 0.0
        %496 = vmatprep.subr.mxu0 0.0
        %497 = vmatpush1.msra.mxu0 0.0
        %498 = vmatprep.subr.mxu0 0.0
        %499 = vmatpush1.msra.mxu0 0.0
        %500 = vmatprep.subr.mxu0 0.0
        %501 = vmatpush1.msra.mxu0 0.0
        %502 = vmatprep.subr.mxu0 0.0
        %503 = vmatpush1.msra.mxu0 0.0
        %504 = vmatprep.subr.mxu0 0.0
        %505 = vmatpush1.msra.mxu0 0.0
        %506 = vmatprep.subr.mxu0 0.0
        %507 = vmatpush1.msra.mxu0 0.0
        %508 = vmatprep.subr.mxu0 0.0
        %509 = vmatpush1.msra.mxu0 0.0
        %510 = vmatprep.subr.mxu0 0.0
        %511 = vmatpush1.msra.mxu0 0.0
        %512 = vmatprep.subr.mxu0 0.0
        %513 = vmatpush1.msra.mxu0 0.0
        %514 = vmatprep.subr.mxu0 0.0
        %515 = vmatpush1.msra.mxu0 0.0
        %516 = vmatprep.mubr.f32.mxu0 0.0
        %v517 = vand.u32 %v223, 4294901760
        %v518 = vsub.f32 %v223, %v517
        %519 = vmatmul.mubr.f32.gmra.mrb[0].mxu0 %v518
        %v520 = vpop.f32.mrb[0].mxu0
        %v521 = vadd.f32 %v423, %v520
        %v522 = vpop.f32.mrb[0].mxu0
        %v523 = vadd.f32 %v425, %v522
        %524 = vmatprep.mubr.f32.mxu0 0.0
        %v525 = vand.u32 %v226, 4294901760
        %v526 = vsub.f32 %v226, %v525
        %527 = vmatmul.mubr.f32.gmra.mrb[0].mxu0 %v526
        %v528 = vpop.f32.mrb[0].mxu0
        %v529 = vadd.f32 %v430, %v528
        %v530 = vpop.f32.mrb[0].mxu0
        %v531 = vadd.f32 %v432, %v530
        %532 = vmatprep.mubr.f32.mxu0 0.0
        %v533 = vand.u32 %v229, 4294901760
        %v534 = vsub.f32 %v229, %v533
        %535 = vmatmul.mubr.f32.gmra.mrb[0].mxu0 %v534
        %v536 = vpop.f32.mrb[0].mxu0
        %v537 = vadd.f32 %v437, %v536
        %v538 = vpop.f32.mrb[0].mxu0
        %v539 = vadd.f32 %v439, %v538
        %540 = vmatprep.mubr.f32.mxu0 0.0
        %v541 = vand.u32 %v232, 4294901760
        %v542 = vsub.f32 %v232, %v541
        %543 = vmatmul.mubr.f32.gmra.mrb[0].mxu0 %v542
        %v544 = vpop.f32.mrb[0].mxu0
        %v545 = vadd.f32 %v444, %v544
        %v546 = vpop.f32.mrb[0].mxu0
        %v547 = vadd.f32 %v446, %v546
        %548 = vdwg.mxu0
        %v549 = vand.u32 %v220, 4294901760
        %550 = vmatprep.subr.mxu0 %v549
        %v551 = vand.u32 %v219, 4294901760
        %552 = vmatpush1.msra.mxu0 %v551
        %553 = vmatprep.subr.mxu0 0.0
        %554 = vmatpush1.msra.mxu0 0.0
        %555 = vmatprep.subr.mxu0 0.0
        %556 = vmatpush1.msra.mxu0 0.0
        %557 = vmatprep.subr.mxu0 0.0
        %558 = vmatpush1.msra.mxu0 0.0
        %559 = vmatprep.subr.mxu0 0.0
        %560 = vmatpush1.msra.mxu0 0.0
        %561 = vmatprep.subr.mxu0 0.0
        %562 = vmatpush1.msra.mxu0 0.0
        %563 = vmatprep.subr.mxu0 0.0
        %564 = vmatpush1.msra.mxu0 0.0
        %565 = vmatprep.subr.mxu0 0.0
        %566 = vmatpush1.msra.mxu0 0.0
        %567 = vmatprep.subr.mxu0 0.0
        %568 = vmatpush1.msra.mxu0 0.0
        %569 = vmatprep.subr.mxu0 0.0
        %570 = vmatpush1.msra.mxu0 0.0
        %571 = vmatprep.subr.mxu0 0.0
        %572 = vmatpush1.msra.mxu0 0.0
        %573 = vmatprep.subr.mxu0 0.0
        %574 = vmatpush1.msra.mxu0 0.0
        %575 = vmatprep.subr.mxu0 0.0
        %576 = vmatpush1.msra.mxu0 0.0
        %577 = vmatprep.subr.mxu0 0.0
        %578 = vmatpush1.msra.mxu0 0.0
        %579 = vmatprep.subr.mxu0 0.0
        %580 = vmatpush1.msra.mxu0 0.0
        %581 = vmatprep.subr.mxu0 0.0
        %582 = vmatpush1.msra.mxu0 0.0
        %583 = vmatprep.subr.mxu0 0.0
        %584 = vmatpush1.msra.mxu0 0.0
        %585 = vmatprep.subr.mxu0 0.0
        %586 = vmatpush1.msra.mxu0 0.0
        %587 = vmatprep.subr.mxu0 0.0
        %588 = vmatpush1.msra.mxu0 0.0
        %589 = vmatprep.subr.mxu0 0.0
        %590 = vmatpush1.msra.mxu0 0.0
        %591 = vmatprep.subr.mxu0 0.0
        %592 = vmatpush1.msra.mxu0 0.0
        %593 = vmatprep.subr.mxu0 0.0
        %594 = vmatpush1.msra.mxu0 0.0
        %595 = vmatprep.subr.mxu0 0.0
        %596 = vmatpush1.msra.mxu0 0.0
        %597 = vmatprep.subr.mxu0 0.0
        %598 = vmatpush1.msra.mxu0 0.0
        %599 = vmatprep.subr.mxu0 0.0
        %600 = vmatpush1.msra.mxu0 0.0
        %601 = vmatprep.subr.mxu0 0.0
        %602 = vmatpush1.msra.mxu0 0.0
        %603 = vmatprep.subr.mxu0 0.0
        %604 = vmatpush1.msra.mxu0 0.0
        %605 = vmatprep.subr.mxu0 0.0
        %606 = vmatpush1.msra.mxu0 0.0
        %607 = vmatprep.subr.mxu0 0.0
        %608 = vmatpush1.msra.mxu0 0.0
        %609 = vmatprep.subr.mxu0 0.0
        %610 = vmatpush1.msra.mxu0 0.0
        %611 = vmatprep.subr.mxu0 0.0
        %612 = vmatpush1.msra.mxu0 0.0
        %613 = vmatprep.subr.mxu0 0.0
        %614 = vmatpush1.msra.mxu0 0.0
        %615 = vmatprep.mubr.f32.mxu0 0.0
        %v616 = vand.u32 %v223, 4294901760
        %v617 = vsub.f32 %v223, %v616
        %v618 = vand.u32 %v617, 4294901760
        %619 = vmatmul.mubr.f32.gmra.mrb[0].mxu0 %v618
        %v620 = vpop.f32.mrb[0].mxu0
        %v621 = vadd.f32 %v521, %v620
        %v622 = vpop.f32.mrb[0].mxu0
        %v623 = vadd.f32 %v523, %v622
        %624 = vmatprep.mubr.f32.mxu0 0.0
        %v625 = vand.u32 %v226, 4294901760
        %v626 = vsub.f32 %v226, %v625
        %v627 = vand.u32 %v626, 4294901760
        %628 = vmatmul.mubr.f32.gmra.mrb[0].mxu0 %v627
        %v629 = vpop.f32.mrb[0].mxu0
        %v630 = vadd.f32 %v529, %v629
        %v631 = vpop.f32.mrb[0].mxu0
        %v632 = vadd.f32 %v531, %v631
        %633 = vmatprep.mubr.f32.mxu0 0.0
        %v634 = vand.u32 %v229, 4294901760
        %v635 = vsub.f32 %v229, %v634
        %v636 = vand.u32 %v635, 4294901760
        %637 = vmatmul.mubr.f32.gmra.mrb[0].mxu0 %v636
        %v638 = vpop.f32.mrb[0].mxu0
        %v639 = vadd.f32 %v537, %v638
        %v640 = vpop.f32.mrb[0].mxu0
        %v641 = vadd.f32 %v539, %v640
        %642 = vmatprep.mubr.f32.mxu0 0.0
        %v643 = vand.u32 %v232, 4294901760
        %v644 = vsub.f32 %v232, %v643
        %v645 = vand.u32 %v644, 4294901760
        %646 = vmatmul.mubr.f32.gmra.mrb[0].mxu0 %v645
        %v647 = vpop.f32.mrb[0].mxu0
        %v648 = vadd.f32 %v545, %v647
        %v649 = vpop.f32.mrb[0].mxu0
        %v650 = vadd.f32 %v547, %v649
        %651 = vdwg.mxu0
        %v652 = vand.u32 %v220, 4294901760
        %v653 = vsub.f32 %v220, %v652
        %v654 = vand.u32 %v653, 4294901760
        %655 = vmatprep.subr.mxu0 %v654
        %v656 = vand.u32 %v219, 4294901760
        %v657 = vsub.f32 %v219, %v656
        %v658 = vand.u32 %v657, 4294901760
        %659 = vmatpush1.msra.mxu0 %v658
        %660 = vmatprep.subr.mxu0 0.0
        %661 = vmatpush1.msra.mxu0 0.0
        %662 = vmatprep.subr.mxu0 0.0
        %663 = vmatpush1.msra.mxu0 0.0
        %664 = vmatprep.subr.mxu0 0.0
        %665 = vmatpush1.msra.mxu0 0.0
        %666 = vmatprep.subr.mxu0 0.0
        %667 = vmatpush1.msra.mxu0 0.0
        %668 = vmatprep.subr.mxu0 0.0
        %669 = vmatpush1.msra.mxu0 0.0
        %670 = vmatprep.subr.mxu0 0.0
        %671 = vmatpush1.msra.mxu0 0.0
        %672 = vmatprep.subr.mxu0 0.0
        %673 = vmatpush1.msra.mxu0 0.0
        %674 = vmatprep.subr.mxu0 0.0
        %675 = vmatpush1.msra.mxu0 0.0
        %676 = vmatprep.subr.mxu0 0.0
        %677 = vmatpush1.msra.mxu0 0.0
        %678 = vmatprep.subr.mxu0 0.0
        %679 = vmatpush1.msra.mxu0 0.0
        %680 = vmatprep.subr.mxu0 0.0
        %681 = vmatpush1.msra.mxu0 0.0
        %682 = vmatprep.subr.mxu0 0.0
        %683 = vmatpush1.msra.mxu0 0.0
        %684 = vmatprep.subr.mxu0 0.0
        %685 = vmatpush1.msra.mxu0 0.0
        %686 = vmatprep.subr.mxu0 0.0
        %687 = vmatpush1.msra.mxu0 0.0
        %688 = vmatprep.subr.mxu0 0.0
        %689 = vmatpush1.msra.mxu0 0.0
        %690 = vmatprep.subr.mxu0 0.0
        %691 = vmatpush1.msra.mxu0 0.0
        %692 = vmatprep.subr.mxu0 0.0
        %693 = vmatpush1.msra.mxu0 0.0
        %694 = vmatprep.subr.mxu0 0.0
        %695 = vmatpush1.msra.mxu0 0.0
        %696 = vmatprep.subr.mxu0 0.0
        %697 = vmatpush1.msra.mxu0 0.0
        %698 = vmatprep.subr.mxu0 0.0
        %699 = vmatpush1.msra.mxu0 0.0
        %700 = vmatprep.subr.mxu0 0.0
        %701 = vmatpush1.msra.mxu0 0.0
        %702 = vmatprep.subr.mxu0 0.0
        %703 = vmatpush1.msra.mxu0 0.0
        %704 = vmatprep.subr.mxu0 0.0
        %705 = vmatpush1.msra.mxu0 0.0
        %706 = vmatprep.subr.mxu0 0.0
        %707 = vmatpush1.msra.mxu0 0.0
        %708 = vmatprep.subr.mxu0 0.0
        %709 = vmatpush1.msra.mxu0 0.0
        %710 = vmatprep.subr.mxu0 0.0
        %711 = vmatpush1.msra.mxu0 0.0
        %712 = vmatprep.subr.mxu0 0.0
        %713 = vmatpush1.msra.mxu0 0.0
        %714 = vmatprep.subr.mxu0 0.0
        %715 = vmatpush1.msra.mxu0 0.0
        %716 = vmatprep.subr.mxu0 0.0
        %717 = vmatpush1.msra.mxu0 0.0
        %718 = vmatprep.subr.mxu0 0.0
        %719 = vmatpush1.msra.mxu0 0.0
        %720 = vmatprep.subr.mxu0 0.0
        %721 = vmatpush1.msra.mxu0 0.0
        %722 = vmatprep.mubr.f32.mxu0 0.0
        %v723 = vand.u32 %v223, 4294901760
        %724 = vmatmul.mubr.f32.gmra.mrb[0].mxu0 %v723
        %v725 = vpop.f32.mrb[0].mxu0
        %v726 = vadd.f32 %v621, %v725
        %v727 = vpop.f32.mrb[0].mxu0
        %v728 = vadd.f32 %v623, %v727
        %729 = vmatprep.mubr.f32.mxu0 0.0
        %v730 = vand.u32 %v226, 4294901760
        %731 = vmatmul.mubr.f32.gmra.mrb[0].mxu0 %v730
        %v732 = vpop.f32.mrb[0].mxu0
        %v733 = vadd.f32 %v630, %v732
        %v734 = vpop.f32.mrb[0].mxu0
        %v735 = vadd.f32 %v632, %v734
        %736 = vmatprep.mubr.f32.mxu0 0.0
        %v737 = vand.u32 %v229, 4294901760
        %738 = vmatmul.mubr.f32.gmra.mrb[0].mxu0 %v737
        %v739 = vpop.f32.mrb[0].mxu0
        %v740 = vadd.f32 %v639, %v739
        %v741 = vpop.f32.mrb[0].mxu0
        %v742 = vadd.f32 %v641, %v741
        %743 = vmatprep.mubr.f32.mxu0 0.0
        %v744 = vand.u32 %v232, 4294901760
        %745 = vmatmul.mubr.f32.gmra.mrb[0].mxu0 %v744
        %v746 = vpop.f32.mrb[0].mxu0
        %v747 = vadd.f32 %v648, %v746
        %v748 = vpop.f32.mrb[0].mxu0
        %v749 = vadd.f32 %v650, %v748
        %750 = vdwg.mxu0
        %v751 = vand.u32 %v220, 4294901760
        %752 = vmatprep.subr.mxu0 %v751
        %v753 = vand.u32 %v219, 4294901760
        %754 = vmatpush1.msra.mxu0 %v753
        %755 = vmatprep.subr.mxu0 0.0
        %756 = vmatpush1.msra.mxu0 0.0
        %757 = vmatprep.subr.mxu0 0.0
        %758 = vmatpush1.msra.mxu0 0.0
        %759 = vmatprep.subr.mxu0 0.0
        %760 = vmatpush1.msra.mxu0 0.0
        %761 = vmatprep.subr.mxu0 0.0
        %762 = vmatpush1.msra.mxu0 0.0
        %763 = vmatprep.subr.mxu0 0.0
        %764 = vmatpush1.msra.mxu0 0.0
        %765 = vmatprep.subr.mxu0 0.0
        %766 = vmatpush1.msra.mxu0 0.0
        %767 = vmatprep.subr.mxu0 0.0
        %768 = vmatpush1.msra.mxu0 0.0
        %769 = vmatprep.subr.mxu0 0.0
        %770 = vmatpush1.msra.mxu0 0.0
        %771 = vmatprep.subr.mxu0 0.0
        %772 = vmatpush1.msra.mxu0 0.0
        %773 = vmatprep.subr.mxu0 0.0
        %774 = vmatpush1.msra.mxu0 0.0
        %775 = vmatprep.subr.mxu0 0.0
        %776 = vmatpush1.msra.mxu0 0.0
        %777 = vmatprep.subr.mxu0 0.0
        %778 = vmatpush1.msra.mxu0 0.0
        %779 = vmatprep.subr.mxu0 0.0
        %780 = vmatpush1.msra.mxu0 0.0
        %781 = vmatprep.subr.mxu0 0.0
        %782 = vmatpush1.msra.mxu0 0.0
        %783 = vmatprep.subr.mxu0 0.0
        %784 = vmatpush1.msra.mxu0 0.0
        %785 = vmatprep.subr.mxu0 0.0
        %786 = vmatpush1.msra.mxu0 0.0
        %787 = vmatprep.subr.mxu0 0.0
        %788 = vmatpush1.msra.mxu0 0.0
        %789 = vmatprep.subr.mxu0 0.0
        %790 = vmatpush1.msra.mxu0 0.0
        %791 = vmatprep.subr.mxu0 0.0
        %792 = vmatpush1.msra.mxu0 0.0
        %793 = vmatprep.subr.mxu0 0.0
        %794 = vmatpush1.msra.mxu0 0.0
        %795 = vmatprep.subr.mxu0 0.0
        %796 = vmatpush1.msra.mxu0 0.0
        %797 = vmatprep.subr.mxu0 0.0
        %798 = vmatpush1.msra.mxu0 0.0
        %799 = vmatprep.subr.mxu0 0.0
        %800 = vmatpush1.msra.mxu0 0.0
        %801 = vmatprep.subr.mxu0 0.0
        %802 = vmatpush1.msra.mxu0 0.0
        %803 = vmatprep.subr.mxu0 0.0
        %804 = vmatpush1.msra.mxu0 0.0
        %805 = vmatprep.subr.mxu0 0.0
        %806 = vmatpush1.msra.mxu0 0.0
        %807 = vmatprep.subr.mxu0 0.0
        %808 = vmatpush1.msra.mxu0 0.0
        %809 = vmatprep.subr.mxu0 0.0
        %810 = vmatpush1.msra.mxu0 0.0
        %811 = vmatprep.subr.mxu0 0.0
        %812 = vmatpush1.msra.mxu0 0.0
        %813 = vmatprep.subr.mxu0 0.0
        %814 = vmatpush1.msra.mxu0 0.0
        %815 = vmatprep.subr.mxu0 0.0
        %816 = vmatpush1.msra.mxu0 0.0
        %817 = vmatprep.mubr.f32.mxu0 0.0
        %v818 = vand.u32 %v223, 4294901760
        %819 = vmatmul.mubr.f32.gmra.mrb[0].mxu0 %v818
        %v820 = vpop.f32.mrb[0].mxu0
        %v821 = vadd.f32 %v726, %v820
        %v822 = vpop.f32.mrb[0].mxu0
        %v823 = vadd.f32 %v728, %v822
        %824 = vmatprep.mubr.f32.mxu0 0.0
        %v825 = vand.u32 %v226, 4294901760
        %826 = vmatmul.mubr.f32.gmra.mrb[0].mxu0 %v825
        %v827 = vpop.f32.mrb[0].mxu0
        %v828 = vadd.f32 %v733, %v827
        %v829 = vpop.f32.mrb[0].mxu0
        %v830 = vadd.f32 %v735, %v829
        %831 = vmatprep.mubr.f32.mxu0 0.0
        %v832 = vand.u32 %v229, 4294901760
        %833 = vmatmul.mubr.f32.gmra.mrb[0].mxu0 %v832
        %v834 = vpop.f32.mrb[0].mxu0
        %v835 = vadd.f32 %v740, %v834
        %v836 = vpop.f32.mrb[0].mxu0
        %v837 = vadd.f32 %v742, %v836
        %838 = vmatprep.mubr.f32.mxu0 0.0
        %v839 = vand.u32 %v232, 4294901760
        %840 = vmatmul.mubr.f32.gmra.mrb[0].mxu0 %v839
        %v841 = vpop.f32.mrb[0].mxu0
        %v842 = vadd.f32 %v747, %v841
        %v843 = vpop.f32.mrb[0].mxu0
        %v844 = vadd.f32 %v749, %v843
        %845 = vdwg.mxu0
        %846 = vst [vmem:[%s161] sm:$0xff] %v821
        %847 = vst [vmem:[%s161 + $0x8] sm:$0xff] %v823
        %848 = vst [vmem:[%s161 + $0x10] sm:$0xff] %v828
        %849 = vst [vmem:[%s161 + $0x18] sm:$0xff] %v830
        %850 = vst [vmem:[%s161 + $0x20] sm:$0xff] %v835
        %851 = vst [vmem:[%s161 + $0x28] sm:$0xff] %v837
        %852 = vst [vmem:[%s161 + $0x30] sm:$0xff] %v842
        %853 = vst [vmem:[%s161 + $0x38] sm:$0xff] %v844
        %s854 = sand.u32 %s87, 1
        %s855 = scalar_lea.sflag [#allocation3], %s854
        %s856 = sand.u32 %s87, 1
        %s857 = smul.addr %s856, 64
        %s858 = scalar_lea.vmem [#allocation2], %s857
        // Predicated region
        $region29: #{tpu_custom_call.1} parent=27 // pred_check
          %p859 = pneg %p97
        $region30: #{tpu_custom_call.1} parent=27 // pred_check_branch
          %861 = sbr.rel (%p859) target = $region32
        $region31: #{tpu_custom_call.1} parent=27 // pred_region
          %s862 = smul.u32 2, %s21
          %s864 = ssub.s32 1024, 1024
          %865 = vsyncadd %s855, %s864
          %s866 = smul.addr %s20, 8
          %s867 = sadd.s32 %s862, %s866
          %s868 = smul.addr %s867, 128
          %s869 = scalar_lea.hbm %s2, %s868
          %s870 = sshll.u32 %s858, 4
          %s871 = int_to_ptr.vmem [resolvable:$true] %s870
          %876 = dma.vmem_to_hbm [thread:$0]  %s871, 1024, %s869, %s855, 256, 256, 16
        $region32: #{tpu_custom_call.1} parent=27 // pred_fallthru
          _
      $region28: #{tpu_custom_call.1} parent=5 // pred_fallthru
        _
      %p877 = scmp.le.s32.totalorder 2, %s11
      // Predicated region
      $region33: #{tpu_custom_call.1} parent=5 // pred_check
        %p878 = pneg %p877
      $region34: #{tpu_custom_call.1} parent=5 // pred_check_branch
        %880 = sbr.rel (%p878) target = $region36
      $region35: #{tpu_custom_call.1} parent=5 // pred_region
        %s881 = ssub.s32 %s11, 2
        // Predicated region
        $region37: #{tpu_custom_call.1} parent=35 // pred_check
          %p882 = pneg %p103
        $region38: #{tpu_custom_call.1} parent=35 // pred_check_branch
          %884 = sbr.rel (%p882) target = $region40
        $region39: #{tpu_custom_call.1} parent=35 // pred_region
          %s885 = sand.u32 %s88, 1
          %s886 = scalar_lea.sflag [#allocation3], %s885
          %s887 = sand.u32 %s88, 1
          %s888 = smul.addr %s887, 64
          %s889 = scalar_lea.vmem [#allocation2], %s888
          %890 = dma.done %s886, 1024
        $region40: #{tpu_custom_call.1} parent=35 // pred_fallthru
          _
      $region36: #{tpu_custom_call.1} parent=5 // pred_fallthru
        _
    $region6: #{tpu_custom_call.1} parent=1 // loop_footer
      %s15 = sadd.s32 1, %s11
    $region7: #{tpu_custom_call.1} parent=1 // loop_footer_branch
      %10 = sbr.rel target = $region3
    $region8: #{tpu_custom_call.1} parent=1 // loop_exit
      _
    %891 = vsyncpa [#allocation3], 1
    %s892 = scalar_lea.sflag [#allocation3], 1
    %893 = vsyncpa %s892, 1

</llo_original>
